<compile_context>
chip_gen: v7x
topology: tpu7x:2x2x1
jax: 0.10.0
libtpu: 0.0.40
codegen_flags: <defaults>
</compile_context>

<pallas_src>
import math
import jax
import jax.numpy as jnp
from jax import lax
from jax.experimental import pallas as pl
from jax.experimental.pallas import tpu as pltpu

# ---------------- model hyper-parameters (small, consistent with module) ----
N_NODES = 128          # number of graph nodes
IN_CH = 32             # in_channels
HID_CH = 64            # hidden_channels
OUT_CH = 16            # out_channels
LATENT_DIM = 8         # unused (with_latent='False')
NUM_LAYERS = 3
K_PROP = 10
ALPHA = 0.1
LN_EPS = 1e-5
N_EDGES = 512

# PyTorch F.gelu default is the exact erf GELU; the tanh approximation routes
# the transcendental to the (otherwise idle) EUP slot.  Set False for exact
# parity with the reference module.
GELU_APPROXIMATE = True


def _gelu(x):
    if GELU_APPROXIMATE:
        return jax.nn.gelu(x, approximate=True)          # tanh approx -> EUP
    return 0.5 * x * (1.0 + lax.erf(x * (1.0 / math.sqrt(2.0))))


def _ln_normalize(x):
    # LayerNorm (no affine; gamma/beta are folded into the next Linear in glue)
    # over the feature axis, which is axis 0 in transposed layout.
    # Two-pass (centered) variance for numerical robustness.
    mean = jnp.mean(x, axis=0, keepdims=True)            # [1, N]
    c = x - mean
    var = jnp.mean(c * c, axis=0, keepdims=True)         # [1, N]
    return c * lax.rsqrt(var + LN_EPS)


# ---------------- fused Pallas kernel: MLP + collapsed APPNP propagation ----
def fused_appnp_kernel(x_ref, w1_ref, w2_ref, w3_ref,
                       b1_ref, b2_ref, b3_ref, p_ref, o_ref):
    # All activations live in [features, nodes] layout; N=128 is the lane axis.
    # Weights / x / P arrive pre-cast to bf16 (glue); accumulation is f32.
    h = jnp.dot(w1_ref[...], x_ref[...],
                preferred_element_type=jnp.float32) + b1_ref[...]   # [HID, N]
    h = _gelu(h)
    h = _ln_normalize(h)
    # dropout: identity (eval mode)
    h = jnp.dot(w2_ref[...], h.astype(jnp.bfloat16),
                preferred_element_type=jnp.float32) + b2_ref[...]   # [HID, N]
    h = _gelu(h)
    h = _ln_normalize(h)
    ht = jnp.dot(w3_ref[...], h.astype(jnp.bfloat16),
                 preferred_element_type=jnp.float32) + b3_ref[...]  # [OUT, N]

    # APPNP: K=10 steps collapsed into one precomputed operator P (glue).
    # out^T = h^T @ P^T  -> single MXU matmul, lane-dense [OUT, N] store.
    o_ref[...] = jnp.dot(ht.astype(jnp.bfloat16), p_ref[...],
                         preferred_element_type=jnp.float32)


_VMEM = pl.BlockSpec(memory_space=pltpu.MemorySpace.VMEM)


# ---------------- glue: parameters, graph operator, forward ------------------
def init_params(key):
    """PyTorch-layout parameters: Linear weights [out, in], biases [out, 1]."""
    ks = jax.random.split(key, 6)

    def linear(kw, kb, fan_in, fan_out):
        bound = 1.0 / math.sqrt(fan_in)
        w = jax.random.uniform(kw, (fan_out, fan_in), jnp.float32, -bound, bound)
        b = jax.random.uniform(kb, (fan_out, 1), jnp.float32, -bound, bound)
        return w, b

    w1, b1 = linear(ks[0], ks[1], IN_CH, HID_CH)
    w2, b2 = linear(ks[2], ks[3], HID_CH, HID_CH)
    w3, b3 = linear(ks[4], ks[5], HID_CH, OUT_CH)
    g1 = jnp.ones((HID_CH, 1), jnp.float32)
    be1 = jnp.zeros((HID_CH, 1), jnp.float32)
    g2 = jnp.ones((HID_CH, 1), jnp.float32)
    be2 = jnp.zeros((HID_CH, 1), jnp.float32)
    return (w1, b1, g1, be1, w2, b2, g2, be2, w3, b3)


def prepare_kernel_params(params):
    """One-time parameter prep (do OUTSIDE the per-call forward):
       * fold each LayerNorm's affine (gamma/beta) into the following Linear:
             W @ (g * z + be) + b  ==  (W * g^T) @ z + (W @ be + b)
       * pre-cast the weight matrices to bf16 (halves weight DMA, removes the
         per-call XLA cast ops)."""
    (w1, b1, g1, be1, w2, b2, g2, be2, w3, b3) = params
    w2f = w2 * g1.reshape(1, -1)
    b2f = w2 @ be1 + b2
    w3f = w3 * g2.reshape(1, -1)
    b3f = w3 @ be2 + b3
    return (w1.astype(jnp.bfloat16),
            w2f.astype(jnp.bfloat16),
            w3f.astype(jnp.bfloat16),
            b1, b2f, b3f)


def build_normalized_adjacency(edge_index, n_nodes):
    """PyG gcn_norm-style D^-1/2 (A + I) D^-1/2 on the given (possibly directed)
    edges: adj[dst, src] = 1 per edge (duplicates accumulate).  Self loops follow
    add_remaining_self_loops: existing self-loop weights are kept, weight 1 is
    added only for nodes without one.  Degree = weighted in-degree (row-sum of
    adj, i.e. flow='source_to_target').  No symmetrization (matches
    torch_geometric APPNP's gcn_norm)."""
    src, dst = edge_index[0], edge_index[1]
    adj = jnp.zeros((n_nodes, n_nodes), jnp.float32).at[dst, src].add(1.0)
    diag = jnp.diagonal(adj)
    adj = adj + jnp.diag(jnp.where(diag > 0.0, 0.0, 1.0))
    deg = jnp.sum(adj, axis=1)
    d_inv_sqrt = jnp.where(deg > 0.0, lax.rsqrt(deg), 0.0)
    return adj * d_inv_sqrt[:, None] * d_inv_sqrt[None, :]


def build_propagation_operator(edge_index, n_nodes):
    """Collapse the K-step APPNP recursion into ONE dense operator (f32 glue):
         P_0 = I ;  P_{k+1} = (1-alpha) * A_hat @ P_k + alpha * I
       so that  z^{(K)} = P_K @ h  exactly (same associativity as the recursion).
    Returns P^T pre-cast to bf16 for the kernel's transposed, lane-dense matmul.
    TODO(synk): when edge_index is reused across calls, hoist/cache this result
    (it is the dominant per-call cost, not the kernel)."""
    a_hat = build_normalized_adjacency(edge_index, n_nodes)
    eye = jnp.eye(n_nodes, dtype=jnp.float32)
    p = eye
    for _ in range(K_PROP):
        p = (1.0 - ALPHA) * (a_hat @ p) + ALPHA * eye
    return p.T.astype(jnp.bfloat16)


@jax.jit
def appnp_net_forward(x, edge_index, kparams):
    """Forward of APPNP_Net (dprate == 0.0, eval mode). kparams from
    prepare_kernel_params(init_params(...))."""
    w1, w2f, w3f, b1, b2f, b3f = kparams
    n = x.shape[0]
    p_t = build_propagation_operator(edge_index, n)       # [N, N] bf16, = P^T

    # TODO(synk): if several graphs/batches are processed per call, add a
    # leading grid axis with dimension_semantics=("parallel",) so v7x's two
    # TensorCores are both used; and if N scales past a few thousand, tile P
    # along the lane axis (BlockSpec((OUT_CH, TILE_N), ...)) to respect v7x's
    # 64 MiB VMEM.  At N=128 / single graph the whole problem fits in VMEM on
    # every generation and a gridless call is optimal.
    out_t = pl.pallas_call(
        fused_appnp_kernel,
        out_shape=jax.ShapeDtypeStruct((OUT_CH, n), jnp.float32),
        in_specs=[_VMEM] * 8,
        out_specs=_VMEM,
    )(x.T.astype(jnp.bfloat16),      # [IN, N]   bf16
      w1,                            # [HID, IN] bf16
      w2f,                           # [HID, HID] bf16 (LN1 gamma folded)
      w3f,                           # [OUT, HID] bf16 (LN2 gamma folded)
      b1,                            # [HID, 1] f32
      b2f,                           # [HID, 1] f32 (LN1 beta folded)
      b3f,                           # [OUT, 1] f32 (LN2 beta folded)
      p_t)                           # [N, N]   bf16 collapsed APPNP operator
    return out_t.T                   # [N, OUT_CH]


if __name__ == "__main__":
    key = jax.random.PRNGKey(0)
    k_x, k_e1, k_e2, k_p = jax.random.split(key, 4)

    # node features [N, in_channels]
    x = jax.random.normal(k_x, (N_NODES, IN_CH), jnp.float32)
    # random edge_index [2, E]
    src = jax.random.randint(k_e1, (N_EDGES,), 0, N_NODES)
    dst = jax.random.randint(k_e2, (N_EDGES,), 0, N_NODES)
    edge_index = jnp.stack([src, dst], axis=0)

    params = init_params(k_p)
    kparams = prepare_kernel_params(params)   # one-time fold + bf16 cast

    out = appnp_net_forward(x, edge_index, kparams)
    jax.block_until_ready(out)
    assert out.shape == (N_NODES, OUT_CH)
    assert bool(jnp.all(jnp.isfinite(out)))
    print("KERNEL_OK")
</pallas_src>

<mosaic_0001>
module attributes {stable_mosaic.version = 11 : i64} {
  func.func private @main(%arg0: i32) attributes {dimension_semantics = [#tpu.dimension_semantics<core_parallel>], iteration_bounds = array<i64: 2>, tpu.core_type = #tpu.core_type<sc_scalar_subcore>, window_params = []} {
    return
  }
}

module attributes {stable_mosaic.version = 11 : i64} {
  func.func private @main(%arg0: i32) attributes {dimension_semantics = [#tpu.dimension_semantics<core_parallel>], iteration_bounds = array<i64: 2>, tpu.core_type = #tpu.core_type<sc_scalar_subcore>, window_params = []} {
    return
  }
}

module attributes {stable_mosaic.version = 11 : i64} {
  func.func @fused_appnp_kernel(%arg0: memref<32x128xbf16, #tpu.memory_space<vmem>>, %arg1: memref<64x32xbf16, #tpu.memory_space<vmem>>, %arg2: memref<64x64xbf16, #tpu.memory_space<vmem>>, %arg3: memref<16x64xbf16, #tpu.memory_space<vmem>>, %arg4: memref<64x1xf32, #tpu.memory_space<vmem>>, %arg5: memref<64x1xf32, #tpu.memory_space<vmem>>, %arg6: memref<16x1xf32, #tpu.memory_space<vmem>>, %arg7: memref<128x128xbf16, #tpu.memory_space<vmem>>, %arg8: memref<16x128xf32, #tpu.memory_space<vmem>>) attributes {dimension_semantics = [], scalar_prefetch = 0 : i64, scratch_operands = 0 : i64, tpu.core_type = #tpu.core_type<tc>} {
    %c0 = arith.constant 0 : index
    %c0_0 = arith.constant 0 : index
    %0 = vector.load %arg1[%c0, %c0_0] : memref<64x32xbf16, #tpu.memory_space<vmem>>, vector<64x32xbf16>
    %c0_1 = arith.constant 0 : index
    %c0_2 = arith.constant 0 : index
    %1 = vector.load %arg0[%c0_1, %c0_2] : memref<32x128xbf16, #tpu.memory_space<vmem>>, vector<32x128xbf16>
    %cst = arith.constant dense<0.000000e+00> : vector<64x128xf32>
    %2 = tpu.matmul %0, %1, %cst {dimension_numbers = #tpu.dot_dimension_numbers<[1], [0], [0], [1], [0, 0, 1, 1], [], []>} : vector<64x32xbf16>, vector<32x128xbf16>, vector<64x128xf32> -> vector<64x128xf32>
    %c0_3 = arith.constant 0 : index
    %c0_4 = arith.constant 0 : index
    %3 = vector.load %arg4[%c0_3, %c0_4] : memref<64x1xf32, #tpu.memory_space<vmem>>, vector<64x1xf32>
    %4 = vector.broadcast %3 : vector<64x1xf32> to vector<64x128xf32>
    %5 = arith.addf %2, %4 : vector<64x128xf32>
    %6 = arith.mulf %5, %5 : vector<64x128xf32>
    %7 = arith.mulf %5, %6 : vector<64x128xf32>
    %cst_5 = arith.constant 4.471500e-02 : f32
    %8 = vector.broadcast %cst_5 : f32 to vector<64x128xf32>
    %9 = arith.mulf %8, %7 : vector<64x128xf32>
    %10 = arith.addf %5, %9 : vector<64x128xf32>
    %cst_6 = arith.constant 0.797884583 : f32
    %11 = vector.broadcast %cst_6 : f32 to vector<64x128xf32>
    %12 = arith.mulf %11, %10 : vector<64x128xf32>
    %13 = math.tanh %12 : vector<64x128xf32>
    %cst_7 = arith.constant 1.000000e+00 : f32
    %14 = vector.broadcast %cst_7 : f32 to vector<64x128xf32>
    %15 = arith.addf %14, %13 : vector<64x128xf32>
    %cst_8 = arith.constant 5.000000e-01 : f32
    %16 = vector.broadcast %cst_8 : f32 to vector<64x128xf32>
    %17 = arith.mulf %16, %15 : vector<64x128xf32>
    %18 = arith.mulf %5, %17 : vector<64x128xf32>
    %cst_9 = arith.constant dense<0.000000e+00> : vector<128xf32>
    %19 = vector.multi_reduction <add>, %18, %cst_9 [0] : vector<64x128xf32> to vector<128xf32>
    %20 = vector.shape_cast %19 : vector<128xf32> to vector<1x128xf32>
    %cst_10 = arith.constant 6.400000e+01 : f32
    %21 = vector.broadcast %cst_10 : f32 to vector<1x128xf32>
    %22 = arith.divf %20, %21 : vector<1x128xf32>
    %23 = vector.broadcast %22 : vector<1x128xf32> to vector<64x128xf32>
    %24 = arith.subf %18, %23 : vector<64x128xf32>
    %25 = arith.mulf %24, %24 : vector<64x128xf32>
    %cst_11 = arith.constant dense<0.000000e+00> : vector<128xf32>
    %26 = vector.multi_reduction <add>, %25, %cst_11 [0] : vector<64x128xf32> to vector<128xf32>
    %27 = vector.shape_cast %26 : vector<128xf32> to vector<1x128xf32>
    %cst_12 = arith.constant 6.400000e+01 : f32
    %28 = vector.broadcast %cst_12 : f32 to vector<1x128xf32>
    %29 = arith.divf %27, %28 : vector<1x128xf32>
    %cst_13 = arith.constant 9.99999974E-6 : f32
    %30 = vector.broadcast %cst_13 : f32 to vector<1x128xf32>
    %31 = arith.addf %29, %30 : vector<1x128xf32>
    %32 = math.rsqrt %31 : vector<1x128xf32>
    %33 = vector.broadcast %32 : vector<1x128xf32> to vector<64x128xf32>
    %34 = arith.mulf %24, %33 : vector<64x128xf32>
    %c0_14 = arith.constant 0 : index
    %c0_15 = arith.constant 0 : index
    %35 = vector.load %arg2[%c0_14, %c0_15] : memref<64x64xbf16, #tpu.memory_space<vmem>>, vector<64x64xbf16>
    %36 = arith.truncf %34 : vector<64x128xf32> to vector<64x128xbf16>
    %cst_16 = arith.constant dense<0.000000e+00> : vector<64x128xf32>
    %37 = tpu.matmul %35, %36, %cst_16 {dimension_numbers = #tpu.dot_dimension_numbers<[1], [0], [0], [1], [0, 0, 1, 1], [], []>} : vector<64x64xbf16>, vector<64x128xbf16>, vector<64x128xf32> -> vector<64x128xf32>
    %c0_17 = arith.constant 0 : index
    %c0_18 = arith.constant 0 : index
    %38 = vector.load %arg5[%c0_17, %c0_18] : memref<64x1xf32, #tpu.memory_space<vmem>>, vector<64x1xf32>
    %39 = vector.broadcast %38 : vector<64x1xf32> to vector<64x128xf32>
    %40 = arith.addf %37, %39 : vector<64x128xf32>
    %41 = arith.mulf %40, %40 : vector<64x128xf32>
    %42 = arith.mulf %40, %41 : vector<64x128xf32>
    %cst_19 = arith.constant 4.471500e-02 : f32
    %43 = vector.broadcast %cst_19 : f32 to vector<64x128xf32>
    %44 = arith.mulf %43, %42 : vector<64x128xf32>
    %45 = arith.addf %40, %44 : vector<64x128xf32>
    %cst_20 = arith.constant 0.797884583 : f32
    %46 = vector.broadcast %cst_20 : f32 to vector<64x128xf32>
    %47 = arith.mulf %46, %45 : vector<64x128xf32>
    %48 = math.tanh %47 : vector<64x128xf32>
    %cst_21 = arith.constant 1.000000e+00 : f32
    %49 = vector.broadcast %cst_21 : f32 to vector<64x128xf32>
    %50 = arith.addf %49, %48 : vector<64x128xf32>
    %cst_22 = arith.constant 5.000000e-01 : f32
    %51 = vector.broadcast %cst_22 : f32 to vector<64x128xf32>
    %52 = arith.mulf %51, %50 : vector<64x128xf32>
    %53 = arith.mulf %40, %52 : vector<64x128xf32>
    %cst_23 = arith.constant dense<0.000000e+00> : vector<128xf32>
    %54 = vector.multi_reduction <add>, %53, %cst_23 [0] : vector<64x128xf32> to vector<128xf32>
    %55 = vector.shape_cast %54 : vector<128xf32> to vector<1x128xf32>
    %cst_24 = arith.constant 6.400000e+01 : f32
    %56 = vector.broadcast %cst_24 : f32 to vector<1x128xf32>
    %57 = arith.divf %55, %56 : vector<1x128xf32>
    %58 = vector.broadcast %57 : vector<1x128xf32> to vector<64x128xf32>
    %59 = arith.subf %53, %58 : vector<64x128xf32>
    %60 = arith.mulf %59, %59 : vector<64x128xf32>
    %cst_25 = arith.constant dense<0.000000e+00> : vector<128xf32>
    %61 = vector.multi_reduction <add>, %60, %cst_25 [0] : vector<64x128xf32> to vector<128xf32>
    %62 = vector.shape_cast %61 : vector<128xf32> to vector<1x128xf32>
    %cst_26 = arith.constant 6.400000e+01 : f32
    %63 = vector.broadcast %cst_26 : f32 to vector<1x128xf32>
    %64 = arith.divf %62, %63 : vector<1x128xf32>
    %cst_27 = arith.constant 9.99999974E-6 : f32
    %65 = vector.broadcast %cst_27 : f32 to vector<1x128xf32>
    %66 = arith.addf %64, %65 : vector<1x128xf32>
    %67 = math.rsqrt %66 : vector<1x128xf32>
    %68 = vector.broadcast %67 : vector<1x128xf32> to vector<64x128xf32>
    %69 = arith.mulf %59, %68 : vector<64x128xf32>
    %c0_28 = arith.constant 0 : index
    %c0_29 = arith.constant 0 : index
    %70 = vector.load %arg3[%c0_28, %c0_29] : memref<16x64xbf16, #tpu.memory_space<vmem>>, vector<16x64xbf16>
    %71 = arith.truncf %69 : vector<64x128xf32> to vector<64x128xbf16>
    %cst_30 = arith.constant dense<0.000000e+00> : vector<16x128xf32>
    %72 = tpu.matmul %70, %71, %cst_30 {dimension_numbers = #tpu.dot_dimension_numbers<[1], [0], [0], [1], [0, 0, 1, 1], [], []>} : vector<16x64xbf16>, vector<64x128xbf16>, vector<16x128xf32> -> vector<16x128xf32>
    %c0_31 = arith.constant 0 : index
    %c0_32 = arith.constant 0 : index
    %73 = vector.load %arg6[%c0_31, %c0_32] : memref<16x1xf32, #tpu.memory_space<vmem>>, vector<16x1xf32>
    %74 = vector.broadcast %73 : vector<16x1xf32> to vector<16x128xf32>
    %75 = arith.addf %72, %74 : vector<16x128xf32>
    %76 = arith.truncf %75 : vector<16x128xf32> to vector<16x128xbf16>
    %c0_33 = arith.constant 0 : index
    %c0_34 = arith.constant 0 : index
    %77 = vector.load %arg7[%c0_33, %c0_34] : memref<128x128xbf16, #tpu.memory_space<vmem>>, vector<128x128xbf16>
    %cst_35 = arith.constant dense<0.000000e+00> : vector<16x128xf32>
    %78 = tpu.matmul %76, %77, %cst_35 {dimension_numbers = #tpu.dot_dimension_numbers<[1], [0], [0], [1], [0, 0, 1, 1], [], []>} : vector<16x128xbf16>, vector<128x128xbf16>, vector<16x128xf32> -> vector<16x128xf32>
    %c0_36 = arith.constant 0 : index
    %c0_37 = arith.constant 0 : index
    %79 = vector.load %arg8[%c0_36, %c0_37] : memref<16x128xf32, #tpu.memory_space<vmem>>, vector<16x128xf32>
    tpu.vector_store %arg8[%c0_36, %c0_37], %78 {strides = array<i32>} : memref<16x128xf32, #tpu.memory_space<vmem>>, vector<16x128xf32>,
    return
  }
}

</mosaic_0001>

<llo_original>
// kernel: appnp_net_forward.1
$region0: #{appnp_net_forward.1}
  #allocation0 [shape = 'u32[]', space=smem, size = 0x4, offset = 0x4, fixed_abs, tag = 'smem constant byte address 0x4 - core index']
  #allocation1 [shape = 'u32[144,128]{1,0:T(1,128)}', space=vmem, size = 0x12000, scoped, tag = 'internal scratch']
  %s0 = inlined_call_operand.vmem [shape: bf16[32,128], index: 0, kind: input, shape index: {}]
  %s1 = inlined_call_operand.vmem [shape: bf16[64,32], index: 1, kind: input, shape index: {}]
  %s2 = inlined_call_operand.vmem [shape: bf16[64,64], index: 2, kind: input, shape index: {}]
  %s3 = inlined_call_operand.vmem [shape: bf16[16,64], index: 3, kind: input, shape index: {}]
  %s4 = inlined_call_operand.vmem [shape: f32[64,1], index: 4, kind: input, shape index: {}]
  %s5 = inlined_call_operand.vmem [shape: f32[64,1], index: 5, kind: input, shape index: {}]
  %s6 = inlined_call_operand.vmem [shape: f32[16,1], index: 6, kind: input, shape index: {}]
  %s7 = inlined_call_operand.vmem [shape: bf16[128,128], index: 7, kind: input, shape index: {}]
  %s8 = inlined_call_operand.hbm [shape: f32[16,128], index: 8, kind: output, shape index: {}]
  %s9 = sld [smem:[#allocation0]]
  $region42: #{appnp_net_forward.1} parent=0
    _
  %s11 = ssub.s32 1, %s9
  %s12 = scalar_select 0, %s11, %s9
  $region1: #{appnp_net_forward.1} parent=0
    #allocation2 [shape = 'u8[8192]{0}', space=vmem, size = 0x2000, scoped, tag = 'output window, operand 0, single buffered']
    #allocation3 [shape = 's32[1]{0}', space=sflag, size = 0x4, scoped, tag = 'scoped memory for appnp_net_forward.1']
    %13 = vsyncpa [#allocation3], 0
    // Predicated region
    $region2: #{appnp_net_forward.1} parent=1 // pred_check
      _
    $region3: #{appnp_net_forward.1} parent=1 // pred_check_branch
      %15 = sbr.rel (0) target = $region5
    $region4: #{appnp_net_forward.1} parent=1 // pred_region
      _
    $region5: #{appnp_net_forward.1} parent=1 // pred_fallthru
      _
    // Predicated region
    $region6: #{appnp_net_forward.1} parent=1 // pred_check
      _
    $region7: #{appnp_net_forward.1} parent=1 // pred_check_branch
      %17 = sbr.rel (0) target = $region9
    $region8: #{appnp_net_forward.1} parent=1 // pred_region
      _
    $region9: #{appnp_net_forward.1} parent=1 // pred_fallthru
      _
    // Predicated region
    $region10: #{appnp_net_forward.1} parent=1 // pred_check
      _
    $region11: #{appnp_net_forward.1} parent=1 // pred_check_branch
      %19 = sbr.rel (0) target = $region13
    $region12: #{appnp_net_forward.1} parent=1 // pred_region
      _
    $region13: #{appnp_net_forward.1} parent=1 // pred_fallthru
      _
    // Predicated region
    $region14: #{appnp_net_forward.1} parent=1 // pred_check
      _
    $region15: #{appnp_net_forward.1} parent=1 // pred_check_branch
      %21 = sbr.rel (0) target = $region17
    $region16: #{appnp_net_forward.1} parent=1 // pred_region
      _
    $region17: #{appnp_net_forward.1} parent=1 // pred_fallthru
      _
    // Predicated region
    $region18: #{appnp_net_forward.1} parent=1 // pred_check
      _
    $region19: #{appnp_net_forward.1} parent=1 // pred_check_branch
      %23 = sbr.rel (0) target = $region21
    $region20: #{appnp_net_forward.1} parent=1 // pred_region
      _
    $region21: #{appnp_net_forward.1} parent=1 // pred_fallthru
      _
    // Predicated region
    $region22: #{appnp_net_forward.1} parent=1 // pred_check
      _
    $region23: #{appnp_net_forward.1} parent=1 // pred_check_branch
      %25 = sbr.rel (0) target = $region25
    $region24: #{appnp_net_forward.1} parent=1 // pred_region
      _
    $region25: #{appnp_net_forward.1} parent=1 // pred_fallthru
      _
    // Predicated region
    $region26: #{appnp_net_forward.1} parent=1 // pred_check
      _
    $region27: #{appnp_net_forward.1} parent=1 // pred_check_branch
      %27 = sbr.rel (0) target = $region29
    $region28: #{appnp_net_forward.1} parent=1 // pred_region
      _
    $region29: #{appnp_net_forward.1} parent=1 // pred_fallthru
      _
    // Predicated region
    $region30: #{appnp_net_forward.1} parent=1 // pred_check
      _
    $region31: #{appnp_net_forward.1} parent=1 // pred_check_branch
      %29 = sbr.rel (0) target = $region33
    $region32: #{appnp_net_forward.1} parent=1 // pred_region
      _
    $region33: #{appnp_net_forward.1} parent=1 // pred_fallthru
      _
    %v31 = vld [vmem:[%s1] sm:$0xf]
    %v32 = vld [vmem:[%s1 + $0x4] sm:$0xf]
    %v33 = vld [vmem:[%s1 + $0x8] sm:$0xf]
    %v34 = vld [vmem:[%s1 + $0xc] sm:$0xf]
    %v35 = vld [vmem:[%s1 + $0x10] sm:$0xf]
    %v36 = vld [vmem:[%s1 + $0x14] sm:$0xf]
    %v37 = vld [vmem:[%s1 + $0x18] sm:$0xf]
    %v38 = vld [vmem:[%s1 + $0x1c] sm:$0xf]
    %v39 = vld [vmem:[%s0] sm:$0xf]
    %v40 = vld [vmem:[%s0 + $0x4] sm:$0xf]
    %v41 = vld [vmem:[%s0 + $0x8] sm:$0xf]
    %v42 = vld [vmem:[%s0 + $0xc] sm:$0xf]
    %v43 = vld [vmem:[%s4] sm:$0xff]
    %v44 = vld [vmem:[%s4 + $0x8] sm:$0xff]
    %v45 = vld [vmem:[%s4 + $0x10] sm:$0xff]
    %v46 = vld [vmem:[%s4 + $0x18] sm:$0xff]
    %v47 = vld [vmem:[%s4 + $0x20] sm:$0xff]
    %v48 = vld [vmem:[%s4 + $0x28] sm:$0xff]
    %v49 = vld [vmem:[%s4 + $0x30] sm:$0xff]
    %v50 = vld [vmem:[%s4 + $0x38] sm:$0xff]
    %52 = vset.pattern.permute.xlu0 0
    %53 = vperm.xlu0 %52, %v43
    %v54 = vpop.permute.xlu0 %53
    %57 = vset.pattern.permute.xlu0 0
    %58 = vperm.xlu0 %57, %v44
    %v59 = vpop.permute.xlu0 %58
    %62 = vset.pattern.permute.xlu0 0
    %63 = vperm.xlu0 %62, %v45
    %v64 = vpop.permute.xlu0 %63
    %67 = vset.pattern.permute.xlu0 0
    %68 = vperm.xlu0 %67, %v46
    %v69 = vpop.permute.xlu0 %68
    %72 = vset.pattern.permute.xlu0 0
    %73 = vperm.xlu0 %72, %v47
    %v74 = vpop.permute.xlu0 %73
    %77 = vset.pattern.permute.xlu0 0
    %78 = vperm.xlu0 %77, %v48
    %v79 = vpop.permute.xlu0 %78
    %82 = vset.pattern.permute.xlu0 0
    %83 = vperm.xlu0 %82, %v49
    %v84 = vpop.permute.xlu0 %83
    %87 = vset.pattern.permute.xlu0 0
    %88 = vperm.xlu0 %87, %v50
    %v89 = vpop.permute.xlu0 %88
    %v99 = vunpack.c.l.b16 %v31
    %v100 = vunpack.c.l.b16 %v32
    %v101 = vunpack.c.l.b16 %v33
    %v102 = vunpack.c.l.b16 %v34
    %v103 = vunpack.c.l.b16 %v35
    %v104 = vunpack.c.l.b16 %v36
    %v105 = vunpack.c.l.b16 %v37
    %v106 = vunpack.c.l.b16 %v38
    %v107 = vpack.c.b16 %v100, %v99
    %v108 = vpack.c.b16 %v102, %v101
    %v109 = vpack.c.b16 %v104, %v103
    %v110 = vpack.c.b16 %v106, %v105
    %v115 = vunpack.c.l.b16 %v39
    %v116 = vunpack.c.l.b16 %v40
    %v117 = vunpack.c.l.b16 %v41
    %v118 = vunpack.c.l.b16 %v42
    %v119 = vpack.c.b16 %v116, %v115
    %v120 = vpack.c.b16 %v118, %v117
    %vm123 = vcmask 261120
    %v125 = vsel %vm123, %v107, 0
    %v128 = vsel %vm123, %v108, 0
    %v131 = vsel %vm123, %v109, 0
    %v134 = vsel %vm123, %v110, 0
    %136 = vmatprep.subr.bf16.mxu0 0
    %137 = vmatpush1.bf16.msra.mxu0 %v119
    %138 = vmatprep.subr.bf16.mxu0 0
    %139 = vmatpush1.bf16.msra.mxu0 %v120
    %140 = vmatprep.subr.bf16.mxu0 0
    %141 = vmatpush1.bf16.msra.mxu0 0
    %142 = vmatprep.subr.bf16.mxu0 0
    %143 = vmatpush1.bf16.msra.mxu0 0
    %144 = vmatprep.subr.bf16.mxu0 0
    %145 = vmatpush1.bf16.msra.mxu0 0
    %146 = vmatprep.subr.bf16.mxu0 0
    %147 = vmatpush1.bf16.msra.mxu0 0
    %148 = vmatprep.subr.bf16.mxu0 0
    %149 = vmatpush1.bf16.msra.mxu0 0
    %150 = vmatprep.subr.bf16.mxu0 0
    %151 = vmatpush1.bf16.msra.mxu0 0
    %152 = vmatprep.subr.bf16.mxu0 0
    %153 = vmatpush1.bf16.msra.mxu0 0
    %154 = vmatprep.subr.bf16.mxu0 0
    %155 = vmatpush1.bf16.msra.mxu0 0
    %156 = vmatprep.subr.bf16.mxu0 0
    %157 = vmatpush1.bf16.msra.mxu0 0
    %158 = vmatprep.subr.bf16.mxu0 0
    %159 = vmatpush1.bf16.msra.mxu0 0
    %160 = vmatprep.subr.bf16.mxu0 0
    %161 = vmatpush1.bf16.msra.mxu0 0
    %162 = vmatprep.subr.bf16.mxu0 0
    %163 = vmatpush1.bf16.msra.mxu0 0
    %164 = vmatprep.subr.bf16.mxu0 0
    %165 = vmatpush1.bf16.msra.mxu0 0
    %166 = vmatprep.subr.bf16.mxu0 0
    %167 = vmatpush1.bf16.msra.mxu0 0
    %168 = vmatprep.mubr.bf16.mxu0 0
    %169 = vmatmul.mubr.bf16.gmra.mrb[0].mxu0 %v125
    %v170 = vpop.f32.mrb[0].mxu0
    %v171 = vadd.f32 %v54, %v170
    %v172 = vpop.f32.mrb[0].mxu0
    %v173 = vpop.f32.mrb[0].mxu0
    %v174 = vadd.f32 %v59, %v173
    %v175 = vpop.f32.mrb[0].mxu0
    %176 = vmatprep.mubr.bf16.mxu0 0
    %177 = vmatmul.mubr.bf16.gmra.mrb[0].mxu0 %v128
    %v178 = vpop.f32.mrb[0].mxu0
    %v179 = vadd.f32 %v64, %v178
    %v180 = vpop.f32.mrb[0].mxu0
    %v181 = vpop.f32.mrb[0].mxu0
    %v182 = vadd.f32 %v69, %v181
    %v183 = vpop.f32.mrb[0].mxu0
    %184 = vmatprep.mubr.bf16.mxu0 0
    %185 = vmatmul.mubr.bf16.gmra.mrb[0].mxu0 %v131
    %v186 = vpop.f32.mrb[0].mxu0
    %v187 = vadd.f32 %v74, %v186
    %v188 = vpop.f32.mrb[0].mxu0
    %v189 = vpop.f32.mrb[0].mxu0
    %v190 = vadd.f32 %v79, %v189
    %v191 = vpop.f32.mrb[0].mxu0
    %192 = vmatprep.mubr.bf16.mxu0 0
    %193 = vmatmul.mubr.bf16.gmra.mrb[0].mxu0 %v134
    %v194 = vpop.f32.mrb[0].mxu0
    %v195 = vadd.f32 %v84, %v194
    %v196 = vpop.f32.mrb[0].mxu0
    %v197 = vpop.f32.mrb[0].mxu0
    %v198 = vadd.f32 %v89, %v197
    %v199 = vpop.f32.mrb[0].mxu0
    %200 = vdwg.mxu0
    %v201 = vmul.f32 %v171, %v171
    %v202 = vmul.f32 %v174, %v174
    %v203 = vmul.f32 %v179, %v179
    %v204 = vmul.f32 %v182, %v182
    %v205 = vmul.f32 %v187, %v187
    %v206 = vmul.f32 %v190, %v190
    %v207 = vmul.f32 %v195, %v195
    %v208 = vmul.f32 %v198, %v198
    %v209 = vmul.f32 %v171, %v201
    %v210 = vmul.f32 %v174, %v202
    %v211 = vmul.f32 %v179, %v203
    %v212 = vmul.f32 %v182, %v204
    %v213 = vmul.f32 %v187, %v205
    %v214 = vmul.f32 %v190, %v206
    %v215 = vmul.f32 %v195, %v207
    %v216 = vmul.f32 %v198, %v208
    %v217 = vmul.f32 %v209, 0.044715
    %v218 = vmul.f32 %v210, 0.044715
    %v219 = vmul.f32 %v211, 0.044715
    %v220 = vmul.f32 %v212, 0.044715
    %v221 = vmul.f32 %v213, 0.044715
    %v222 = vmul.f32 %v214, 0.044715
    %v223 = vmul.f32 %v215, 0.044715
    %v224 = vmul.f32 %v216, 0.044715
    %v225 = vadd.f32 %v171, %v217
    %v226 = vadd.f32 %v174, %v218
    %v227 = vadd.f32 %v179, %v219
    %v228 = vadd.f32 %v182, %v220
    %v229 = vadd.f32 %v187, %v221
    %v230 = vadd.f32 %v190, %v222
    %v231 = vadd.f32 %v195, %v223
    %v232 = vadd.f32 %v198, %v224
    %v233 = vmul.f32 %v225, 0.7978846
    %v234 = vmul.f32 %v226, 0.7978846
    %v235 = vmul.f32 %v227, 0.7978846
    %v236 = vmul.f32 %v228, 0.7978846
    %v237 = vmul.f32 %v229, 0.7978846
    %v238 = vmul.f32 %v230, 0.7978846
    %v239 = vmul.f32 %v231, 0.7978846
    %v240 = vmul.f32 %v232, 0.7978846
    %v241 = vtanh.pop %v233
    %v242 = vtanh.pop %v234
    %v243 = vtanh.pop %v235
    %v244 = vtanh.pop %v236
    %v245 = vtanh.pop %v237
    %v246 = vtanh.pop %v238
    %v247 = vtanh.pop %v239
    %v248 = vtanh.pop %v240
    %v249 = vadd.f32 %v241, 1.0
    %v250 = vadd.f32 %v242, 1.0
    %v251 = vadd.f32 %v243, 1.0
    %v252 = vadd.f32 %v244, 1.0
    %v253 = vadd.f32 %v245, 1.0
    %v254 = vadd.f32 %v246, 1.0
    %v255 = vadd.f32 %v247, 1.0
    %v256 = vadd.f32 %v248, 1.0
    %v257 = vmul.f32 %v249, 0.5
    %v258 = vmul.f32 %v250, 0.5
    %v259 = vmul.f32 %v251, 0.5
    %v260 = vmul.f32 %v252, 0.5
    %v261 = vmul.f32 %v253, 0.5
    %v262 = vmul.f32 %v254, 0.5
    %v263 = vmul.f32 %v255, 0.5
    %v264 = vmul.f32 %v256, 0.5
    %v265 = vmul.f32 %v171, %v257
    %v266 = vmul.f32 %v174, %v258
    %v267 = vmul.f32 %v179, %v259
    %v268 = vmul.f32 %v182, %v260
    %v269 = vmul.f32 %v187, %v261
    %v270 = vmul.f32 %v190, %v262
    %v271 = vmul.f32 %v195, %v263
    %v272 = vmul.f32 %v198, %v264
    %v273 = vadd.f32 %v265, %v266
    %v274 = vadd.f32 %v273, %v267
    %v275 = vadd.f32 %v274, %v268
    %v276 = vadd.f32 %v275, %v269
    %v277 = vadd.f32 %v276, %v270
    %v278 = vadd.f32 %v277, %v271
    %v279 = vadd.f32 %v278, %v272
    %v280 = vrot.slane %v279, 4
    %v281 = vadd.f32 %v279, %v280
    %v282 = vrot.slane %v281, 2
    %v283 = vadd.f32 %v281, %v282
    %v284 = vrot.slane %v283, 1
    %v285 = vadd.f32 %v283, %v284
    %v286 = vrcp.pop 64.0
    %v287 = vmul.f32 %v285, %v286
    %v288 = vsub.f32 %v265, %v287
    %v289 = vsub.f32 %v266, %v287
    %v290 = vsub.f32 %v267, %v287
    %v291 = vsub.f32 %v268, %v287
    %v292 = vsub.f32 %v269, %v287
    %v293 = vsub.f32 %v270, %v287
    %v294 = vsub.f32 %v271, %v287
    %v295 = vsub.f32 %v272, %v287
    %v296 = vmul.f32 %v288, %v288
    %v297 = vmul.f32 %v289, %v289
    %v298 = vmul.f32 %v290, %v290
    %v299 = vmul.f32 %v291, %v291
    %v300 = vmul.f32 %v292, %v292
    %v301 = vmul.f32 %v293, %v293
    %v302 = vmul.f32 %v294, %v294
    %v303 = vmul.f32 %v295, %v295
    %v304 = vadd.f32 %v296, %v297
    %v305 = vadd.f32 %v304, %v298
    %v306 = vadd.f32 %v305, %v299
    %v307 = vadd.f32 %v306, %v300
    %v308 = vadd.f32 %v307, %v301
    %v309 = vadd.f32 %v308, %v302
    %v310 = vadd.f32 %v309, %v303
    %v311 = vrot.slane %v310, 4
    %v312 = vadd.f32 %v310, %v311
    %v313 = vrot.slane %v312, 2
    %v314 = vadd.f32 %v312, %v313
    %v315 = vrot.slane %v314, 1
    %v316 = vadd.f32 %v314, %v315
    %v317 = vmul.f32 %v316, %v286
    %v318 = vadd.f32 %v317, 1e-05
    %v319 = vrsqrt.pop %v318
    %v320 = vmul.f32 %v288, %v319
    %v321 = vmul.f32 %v289, %v319
    %v322 = vmul.f32 %v290, %v319
    %v323 = vmul.f32 %v291, %v319
    %v324 = vmul.f32 %v292, %v319
    %v325 = vmul.f32 %v293, %v319
    %v326 = vmul.f32 %v294, %v319
    %v327 = vmul.f32 %v295, %v319
    %v328 = vld [vmem:[%s2] sm:$0xf]
    %v329 = vld [vmem:[%s2 + $0x4] sm:$0xf]
    %v330 = vld [vmem:[%s2 + $0x8] sm:$0xf]
    %v331 = vld [vmem:[%s2 + $0xc] sm:$0xf]
    %v332 = vld [vmem:[%s2 + $0x10] sm:$0xf]
    %v333 = vld [vmem:[%s2 + $0x14] sm:$0xf]
    %v334 = vld [vmem:[%s2 + $0x18] sm:$0xf]
    %v335 = vld [vmem:[%s2 + $0x1c] sm:$0xf]
    %v336 = vpack.c.bf16 %v321, %v320
    %v337 = vpack.c.bf16 %v323, %v322
    %v338 = vpack.c.bf16 %v325, %v324
    %v339 = vpack.c.bf16 %v327, %v326
    %v340 = vld [vmem:[%s5] sm:$0xff]
    %v341 = vld [vmem:[%s5 + $0x8] sm:$0xff]
    %v342 = vld [vmem:[%s5 + $0x10] sm:$0xff]
    %v343 = vld [vmem:[%s5 + $0x18] sm:$0xff]
    %v344 = vld [vmem:[%s5 + $0x20] sm:$0xff]
    %v345 = vld [vmem:[%s5 + $0x28] sm:$0xff]
    %v346 = vld [vmem:[%s5 + $0x30] sm:$0xff]
    %v347 = vld [vmem:[%s5 + $0x38] sm:$0xff]
    %349 = vset.pattern.permute.xlu0 0
    %350 = vperm.xlu0 %349, %v340
    %v351 = vpop.permute.xlu0 %350
    %354 = vset.pattern.permute.xlu0 0
    %355 = vperm.xlu0 %354, %v341
    %v356 = vpop.permute.xlu0 %355
    %359 = vset.pattern.permute.xlu0 0
    %360 = vperm.xlu0 %359, %v342
    %v361 = vpop.permute.xlu0 %360
    %364 = vset.pattern.permute.xlu0 0
    %365 = vperm.xlu0 %364, %v343
    %v366 = vpop.permute.xlu0 %365
    %369 = vset.pattern.permute.xlu0 0
    %370 = vperm.xlu0 %369, %v344
    %v371 = vpop.permute.xlu0 %370
    %374 = vset.pattern.permute.xlu0 0
    %375 = vperm.xlu0 %374, %v345
    %v376 = vpop.permute.xlu0 %375
    %379 = vset.pattern.permute.xlu0 0
    %380 = vperm.xlu0 %379, %v346
    %v381 = vpop.permute.xlu0 %380
    %384 = vset.pattern.permute.xlu0 0
    %385 = vperm.xlu0 %384, %v347
    %v386 = vpop.permute.xlu0 %385
    %v396 = vunpack.c.l.b16 %v328
    %v397 = vunpack.c.l.b16 %v329
    %v398 = vunpack.c.l.b16 %v330
    %v399 = vunpack.c.l.b16 %v331
    %v400 = vunpack.c.l.b16 %v332
    %v401 = vunpack.c.l.b16 %v333
    %v402 = vunpack.c.l.b16 %v334
    %v403 = vunpack.c.l.b16 %v335
    %v404 = vpack.c.b16 %v397, %v396
    %v405 = vpack.c.b16 %v399, %v398
    %v406 = vpack.c.b16 %v401, %v400
    %v407 = vpack.c.b16 %v403, %v402
    %vm408 = vcmask 523264
    %v410 = vsel %vm408, %v404, 0
    %v413 = vsel %vm408, %v405, 0
    %v416 = vsel %vm408, %v406, 0
    %v419 = vsel %vm408, %v407, 0
    %421 = vmatprep.subr.bf16.mxu0 0
    %422 = vmatpush1.bf16.msra.mxu0 %v336
    %423 = vmatprep.subr.bf16.mxu0 0
    %424 = vmatpush1.bf16.msra.mxu0 %v337
    %425 = vmatprep.subr.bf16.mxu0 0
    %426 = vmatpush1.bf16.msra.mxu0 %v338
    %427 = vmatprep.subr.bf16.mxu0 0
    %428 = vmatpush1.bf16.msra.mxu0 %v339
    %429 = vmatprep.subr.bf16.mxu0 0
    %430 = vmatpush1.bf16.msra.mxu0 0
    %431 = vmatprep.subr.bf16.mxu0 0
    %432 = vmatpush1.bf16.msra.mxu0 0
    %433 = vmatprep.subr.bf16.mxu0 0
    %434 = vmatpush1.bf16.msra.mxu0 0
    %435 = vmatprep.subr.bf16.mxu0 0
    %436 = vmatpush1.bf16.msra.mxu0 0
    %437 = vmatprep.subr.bf16.mxu0 0
    %438 = vmatpush1.bf16.msra.mxu0 0
    %439 = vmatprep.subr.bf16.mxu0 0
    %440 = vmatpush1.bf16.msra.mxu0 0
    %441 = vmatprep.subr.bf16.mxu0 0
    %442 = vmatpush1.bf16.msra.mxu0 0
    %443 = vmatprep.subr.bf16.mxu0 0
    %444 = vmatpush1.bf16.msra.mxu0 0
    %445 = vmatprep.subr.bf16.mxu0 0
    %446 = vmatpush1.bf16.msra.mxu0 0
    %447 = vmatprep.subr.bf16.mxu0 0
    %448 = vmatpush1.bf16.msra.mxu0 0
    %449 = vmatprep.subr.bf16.mxu0 0
    %450 = vmatpush1.bf16.msra.mxu0 0
    %451 = vmatprep.subr.bf16.mxu0 0
    %452 = vmatpush1.bf16.msra.mxu0 0
    %453 = vmatprep.mubr.bf16.mxu0 0
    %454 = vmatmul.mubr.bf16.gmra.mrb[0].mxu0 %v410
    %v455 = vpop.f32.mrb[0].mxu0
    %v456 = vadd.f32 %v351, %v455
    %v457 = vpop.f32.mrb[0].mxu0
    %v458 = vpop.f32.mrb[0].mxu0
    %v459 = vadd.f32 %v356, %v458
    %v460 = vpop.f32.mrb[0].mxu0
    %461 = vmatprep.mubr.bf16.mxu0 0
    %462 = vmatmul.mubr.bf16.gmra.mrb[0].mxu0 %v413
    %v463 = vpop.f32.mrb[0].mxu0
    %v464 = vadd.f32 %v361, %v463
    %v465 = vpop.f32.mrb[0].mxu0
    %v466 = vpop.f32.mrb[0].mxu0
    %v467 = vadd.f32 %v366, %v466
    %v468 = vpop.f32.mrb[0].mxu0
    %469 = vmatprep.mubr.bf16.mxu0 0
    %470 = vmatmul.mubr.bf16.gmra.mrb[0].mxu0 %v416
    %v471 = vpop.f32.mrb[0].mxu0
    %v472 = vadd.f32 %v371, %v471
    %v473 = vpop.f32.mrb[0].mxu0
    %v474 = vpop.f32.mrb[0].mxu0
    %v475 = vadd.f32 %v376, %v474
    %v476 = vpop.f32.mrb[0].mxu0
    %477 = vmatprep.mubr.bf16.mxu0 0
    %478 = vmatmul.mubr.bf16.gmra.mrb[0].mxu0 %v419
    %v479 = vpop.f32.mrb[0].mxu0
    %v480 = vadd.f32 %v381, %v479
    %v481 = vpop.f32.mrb[0].mxu0
    %v482 = vpop.f32.mrb[0].mxu0
    %v483 = vadd.f32 %v386, %v482
    %v484 = vpop.f32.mrb[0].mxu0
    %485 = vdwg.mxu0
    %v486 = vmul.f32 %v456, %v456
    %v487 = vmul.f32 %v459, %v459
    %v488 = vmul.f32 %v464, %v464
    %v489 = vmul.f32 %v467, %v467
    %v490 = vmul.f32 %v472, %v472
    %v491 = vmul.f32 %v475, %v475
    %v492 = vmul.f32 %v480, %v480
    %v493 = vmul.f32 %v483, %v483
    %v494 = vmul.f32 %v456, %v486
    %v495 = vmul.f32 %v459, %v487
    %v496 = vmul.f32 %v464, %v488
    %v497 = vmul.f32 %v467, %v489
    %v498 = vmul.f32 %v472, %v490
    %v499 = vmul.f32 %v475, %v491
    %v500 = vmul.f32 %v480, %v492
    %v501 = vmul.f32 %v483, %v493
    %v502 = vmul.f32 %v494, 0.044715
    %v503 = vmul.f32 %v495, 0.044715
    %v504 = vmul.f32 %v496, 0.044715
    %v505 = vmul.f32 %v497, 0.044715
    %v506 = vmul.f32 %v498, 0.044715
    %v507 = vmul.f32 %v499, 0.044715
    %v508 = vmul.f32 %v500, 0.044715
    %v509 = vmul.f32 %v501, 0.044715
    %v510 = vadd.f32 %v456, %v502
    %v511 = vadd.f32 %v459, %v503
    %v512 = vadd.f32 %v464, %v504
    %v513 = vadd.f32 %v467, %v505
    %v514 = vadd.f32 %v472, %v506
    %v515 = vadd.f32 %v475, %v507
    %v516 = vadd.f32 %v480, %v508
    %v517 = vadd.f32 %v483, %v509
    %v518 = vmul.f32 %v510, 0.7978846
    %v519 = vmul.f32 %v511, 0.7978846
    %v520 = vmul.f32 %v512, 0.7978846
    %v521 = vmul.f32 %v513, 0.7978846
    %v522 = vmul.f32 %v514, 0.7978846
    %v523 = vmul.f32 %v515, 0.7978846
    %v524 = vmul.f32 %v516, 0.7978846
    %v525 = vmul.f32 %v517, 0.7978846
    %v526 = vtanh.pop %v518
    %v527 = vtanh.pop %v519
    %v528 = vtanh.pop %v520
    %v529 = vtanh.pop %v521
    %v530 = vtanh.pop %v522
    %v531 = vtanh.pop %v523
    %v532 = vtanh.pop %v524
    %v533 = vtanh.pop %v525
    %v534 = vadd.f32 %v526, 1.0
    %v535 = vadd.f32 %v527, 1.0
    %v536 = vadd.f32 %v528, 1.0
    %v537 = vadd.f32 %v529, 1.0
    %v538 = vadd.f32 %v530, 1.0
    %v539 = vadd.f32 %v531, 1.0
    %v540 = vadd.f32 %v532, 1.0
    %v541 = vadd.f32 %v533, 1.0
    %v542 = vmul.f32 %v534, 0.5
    %v543 = vmul.f32 %v535, 0.5
    %v544 = vmul.f32 %v536, 0.5
    %v545 = vmul.f32 %v537, 0.5
    %v546 = vmul.f32 %v538, 0.5
    %v547 = vmul.f32 %v539, 0.5
    %v548 = vmul.f32 %v540, 0.5
    %v549 = vmul.f32 %v541, 0.5
    %v550 = vmul.f32 %v456, %v542
    %v551 = vmul.f32 %v459, %v543
    %v552 = vmul.f32 %v464, %v544
    %v553 = vmul.f32 %v467, %v545
    %v554 = vmul.f32 %v472, %v546
    %v555 = vmul.f32 %v475, %v547
    %v556 = vmul.f32 %v480, %v548
    %v557 = vmul.f32 %v483, %v549
    %v558 = vadd.f32 %v550, %v551
    %v559 = vadd.f32 %v558, %v552
    %v560 = vadd.f32 %v559, %v553
    %v561 = vadd.f32 %v560, %v554
    %v562 = vadd.f32 %v561, %v555
    %v563 = vadd.f32 %v562, %v556
    %v564 = vadd.f32 %v563, %v557
    %v565 = vrot.slane %v564, 4
    %v566 = vadd.f32 %v564, %v565
    %v567 = vrot.slane %v566, 2
    %v568 = vadd.f32 %v566, %v567
    %v569 = vrot.slane %v568, 1
    %v570 = vadd.f32 %v568, %v569
    %v571 = vmul.f32 %v570, %v286
    %v572 = vsub.f32 %v550, %v571
    %v573 = vsub.f32 %v551, %v571
    %v574 = vsub.f32 %v552, %v571
    %v575 = vsub.f32 %v553, %v571
    %v576 = vsub.f32 %v554, %v571
    %v577 = vsub.f32 %v555, %v571
    %v578 = vsub.f32 %v556, %v571
    %v579 = vsub.f32 %v557, %v571
    %v580 = vmul.f32 %v572, %v572
    %v581 = vmul.f32 %v573, %v573
    %v582 = vmul.f32 %v574, %v574
    %v583 = vmul.f32 %v575, %v575
    %v584 = vmul.f32 %v576, %v576
    %v585 = vmul.f32 %v577, %v577
    %v586 = vmul.f32 %v578, %v578
    %v587 = vmul.f32 %v579, %v579
    %v588 = vadd.f32 %v580, %v581
    %v589 = vadd.f32 %v588, %v582
    %v590 = vadd.f32 %v589, %v583
    %v591 = vadd.f32 %v590, %v584
    %v592 = vadd.f32 %v591, %v585
    %v593 = vadd.f32 %v592, %v586
    %v594 = vadd.f32 %v593, %v587
    %v595 = vrot.slane %v594, 4
    %v596 = vadd.f32 %v594, %v595
    %v597 = vrot.slane %v596, 2
    %v598 = vadd.f32 %v596, %v597
    %v599 = vrot.slane %v598, 1
    %v600 = vadd.f32 %v598, %v599
    %v601 = vmul.f32 %v600, %v286
    %v602 = vadd.f32 %v601, 1e-05
    %v603 = vrsqrt.pop %v602
    %v604 = vmul.f32 %v572, %v603
    %v605 = vmul.f32 %v573, %v603
    %v606 = vmul.f32 %v574, %v603
    %v607 = vmul.f32 %v575, %v603
    %v608 = vmul.f32 %v576, %v603
    %v609 = vmul.f32 %v577, %v603
    %v610 = vmul.f32 %v578, %v603
    %v611 = vmul.f32 %v579, %v603
    %v612 = vld [vmem:[%s3] sm:$0xf]
    %v613 = vld [vmem:[%s3 + $0x4] sm:$0xf]
    %v614 = vpack.c.bf16 %v605, %v604
    %v615 = vpack.c.bf16 %v607, %v606
    %v616 = vpack.c.bf16 %v609, %v608
    %v617 = vpack.c.bf16 %v611, %v610
    %v618 = vld [vmem:[%s6] sm:$0xff]
    %v619 = vld [vmem:[%s6 + $0x8] sm:$0xff]
    %621 = vset.pattern.permute.xlu0 0
    %622 = vperm.xlu0 %621, %v618
    %v623 = vpop.permute.xlu0 %622
    %626 = vset.pattern.permute.xlu0 0
    %627 = vperm.xlu0 %626, %v619
    %v628 = vpop.permute.xlu0 %627
    %v632 = vunpack.c.l.b16 %v612
    %v633 = vunpack.c.l.b16 %v613
    %v634 = vpack.c.b16 %v633, %v632
    %v636 = vsel %vm408, %v634, 0
    %638 = vmatprep.subr.bf16.mxu0 0
    %639 = vmatpush1.bf16.msra.mxu0 %v614
    %640 = vmatprep.subr.bf16.mxu0 0
    %641 = vmatpush1.bf16.msra.mxu0 %v615
    %642 = vmatprep.subr.bf16.mxu0 0
    %643 = vmatpush1.bf16.msra.mxu0 %v616
    %644 = vmatprep.subr.bf16.mxu0 0
    %645 = vmatpush1.bf16.msra.mxu0 %v617
    %646 = vmatprep.subr.bf16.mxu0 0
    %647 = vmatpush1.bf16.msra.mxu0 0
    %648 = vmatprep.subr.bf16.mxu0 0
    %649 = vmatpush1.bf16.msra.mxu0 0
    %650 = vmatprep.subr.bf16.mxu0 0
    %651 = vmatpush1.bf16.msra.mxu0 0
    %652 = vmatprep.subr.bf16.mxu0 0
    %653 = vmatpush1.bf16.msra.mxu0 0
    %654 = vmatprep.subr.bf16.mxu0 0
    %655 = vmatpush1.bf16.msra.mxu0 0
    %656 = vmatprep.subr.bf16.mxu0 0
    %657 = vmatpush1.bf16.msra.mxu0 0
    %658 = vmatprep.subr.bf16.mxu0 0
    %659 = vmatpush1.bf16.msra.mxu0 0
    %660 = vmatprep.subr.bf16.mxu0 0
    %661 = vmatpush1.bf16.msra.mxu0 0
    %662 = vmatprep.subr.bf16.mxu0 0
    %663 = vmatpush1.bf16.msra.mxu0 0
    %664 = vmatprep.subr.bf16.mxu0 0
    %665 = vmatpush1.bf16.msra.mxu0 0
    %666 = vmatprep.subr.bf16.mxu0 0
    %667 = vmatpush1.bf16.msra.mxu0 0
    %668 = vmatprep.subr.bf16.mxu0 0
    %669 = vmatpush1.bf16.msra.mxu0 0
    %670 = vmatprep.mubr.bf16.mxu0 0
    %671 = vmatmul.mubr.bf16.gmra.mrb[0].mxu0 %v636
    %v672 = vpop.f32.mrb[0].mxu0
    %v673 = vadd.f32 %v623, %v672
    %v674 = vpop.f32.mrb[0].mxu0
    %v675 = vpop.f32.mrb[0].mxu0
    %v676 = vadd.f32 %v628, %v675
    %v677 = vpop.f32.mrb[0].mxu0
    %678 = vdwg.mxu0
    %v679 = vpack.c.bf16 %v676, %v673
    %v680 = vld [vmem:[%s7] sm:$0xf]
    %v681 = vld [vmem:[%s7 + $0x4] sm:$0xf]
    %v682 = vld [vmem:[%s7 + $0x8] sm:$0xf]
    %v683 = vld [vmem:[%s7 + $0xc] sm:$0xf]
    %v684 = vld [vmem:[%s7 + $0x10] sm:$0xf]
    %v685 = vld [vmem:[%s7 + $0x14] sm:$0xf]
    %v686 = vld [vmem:[%s7 + $0x18] sm:$0xf]
    %v687 = vld [vmem:[%s7 + $0x1c] sm:$0xf]
    %v688 = vld [vmem:[%s7 + $0x20] sm:$0xf]
    %v689 = vld [vmem:[%s7 + $0x24] sm:$0xf]
    %v690 = vld [vmem:[%s7 + $0x28] sm:$0xf]
    %v691 = vld [vmem:[%s7 + $0x2c] sm:$0xf]
    %v692 = vld [vmem:[%s7 + $0x30] sm:$0xf]
    %v693 = vld [vmem:[%s7 + $0x34] sm:$0xf]
    %v694 = vld [vmem:[%s7 + $0x38] sm:$0xf]
    %v695 = vld [vmem:[%s7 + $0x3c] sm:$0xf]
    %v712 = vunpack.c.l.b16 %v680
    %v713 = vunpack.c.l.b16 %v681
    %v714 = vunpack.c.l.b16 %v682
    %v715 = vunpack.c.l.b16 %v683
    %v716 = vunpack.c.l.b16 %v684
    %v717 = vunpack.c.l.b16 %v685
    %v718 = vunpack.c.l.b16 %v686
    %v719 = vunpack.c.l.b16 %v687
    %v720 = vunpack.c.l.b16 %v688
    %v721 = vunpack.c.l.b16 %v689
    %v722 = vunpack.c.l.b16 %v690
    %v723 = vunpack.c.l.b16 %v691
    %v724 = vunpack.c.l.b16 %v692
    %v725 = vunpack.c.l.b16 %v693
    %v726 = vunpack.c.l.b16 %v694
    %v727 = vunpack.c.l.b16 %v695
    %v728 = vpack.c.b16 %v713, %v712
    %v729 = vpack.c.b16 %v715, %v714
    %v730 = vpack.c.b16 %v717, %v716
    %v731 = vpack.c.b16 %v719, %v718
    %v732 = vpack.c.b16 %v721, %v720
    %v733 = vpack.c.b16 %v723, %v722
    %v734 = vpack.c.b16 %v725, %v724
    %v735 = vpack.c.b16 %v727, %v726
    %744 = vmatprep.subr.bf16.mxu0 0
    %745 = vmatpush1.bf16.msra.mxu0 %v728
    %746 = vmatprep.subr.bf16.mxu0 0
    %747 = vmatpush1.bf16.msra.mxu0 %v729
    %748 = vmatprep.subr.bf16.mxu0 0
    %749 = vmatpush1.bf16.msra.mxu0 %v730
    %750 = vmatprep.subr.bf16.mxu0 0
    %751 = vmatpush1.bf16.msra.mxu0 %v731
    %752 = vmatprep.subr.bf16.mxu0 0
    %753 = vmatpush1.bf16.msra.mxu0 %v732
    %754 = vmatprep.subr.bf16.mxu0 0
    %755 = vmatpush1.bf16.msra.mxu0 %v733
    %756 = vmatprep.subr.bf16.mxu0 0
    %757 = vmatpush1.bf16.msra.mxu0 %v734
    %758 = vmatprep.subr.bf16.mxu0 0
    %759 = vmatpush1.bf16.msra.mxu0 %v735
    %760 = vmatprep.subr.bf16.mxu0 0
    %761 = vmatpush1.bf16.msra.mxu0 0
    %762 = vmatprep.subr.bf16.mxu0 0
    %763 = vmatpush1.bf16.msra.mxu0 0
    %764 = vmatprep.subr.bf16.mxu0 0
    %765 = vmatpush1.bf16.msra.mxu0 0
    %766 = vmatprep.subr.bf16.mxu0 0
    %767 = vmatpush1.bf16.msra.mxu0 0
    %768 = vmatprep.subr.bf16.mxu0 0
    %769 = vmatpush1.bf16.msra.mxu0 0
    %770 = vmatprep.subr.bf16.mxu0 0
    %771 = vmatpush1.bf16.msra.mxu0 0
    %772 = vmatprep.subr.bf16.mxu0 0
    %773 = vmatpush1.bf16.msra.mxu0 0
    %774 = vmatprep.subr.bf16.mxu0 0
    %775 = vmatpush1.bf16.msra.mxu0 0
    %776 = vmatprep.mubr.bf16.mxu0 0
    %777 = vmatmul.mubr.bf16.gmra.mrb[0].mxu0 %v679
    %v778 = vpop.f32.mrb[0].mxu0
    %v779 = vadd.f32 0.0, %v778
    %v780 = vpop.f32.mrb[0].mxu0
    %v781 = vpop.f32.mrb[0].mxu0
    %v782 = vadd.f32 0.0, %v781
    %v783 = vpop.f32.mrb[0].mxu0
    %784 = vdwg.mxu0
    %785 = vst [vmem:[#allocation2] sm:$0xff] %v779
    %786 = vst [vmem:[#allocation2 + $0x8] sm:$0xff] %v782
    // Predicated region
    $region34: #{appnp_net_forward.1} parent=1 // pred_check
      _
    $region35: #{appnp_net_forward.1} parent=1 // pred_check_branch
      %788 = sbr.rel (0) target = $region37
    $region36: #{appnp_net_forward.1} parent=1 // pred_region
      %s790 = ssub.s32 256, 256
      %791 = vsyncadd [#allocation3], %s790
      %s792 = sshll.u32 [#allocation2], 4
      %s793 = int_to_ptr.vmem [resolvable:$true] %s792
      %798 = dma.vmem_to_hbm [thread:$0]  %s793, 256, %s8, [#allocation3], 128, 128, 8
    $region37: #{appnp_net_forward.1} parent=1 // pred_fallthru
      _
    // Predicated region
    $region38: #{appnp_net_forward.1} parent=1 // pred_check
      _
    $region39: #{appnp_net_forward.1} parent=1 // pred_check_branch
      %800 = sbr.rel (0) target = $region41
    $region40: #{appnp_net_forward.1} parent=1 // pred_region
      %801 = dma.done [#allocation3], 256
    $region41: #{appnp_net_forward.1} parent=1 // pred_fallthru
      _
    %802 = vsyncpa [#allocation3], 1

</llo_original>
